<compile_context>
chip_gen: v5e
topology: v5e:2x2
jax: 0.10.0
libtpu: 0.0.40
codegen_flags: <defaults>
</compile_context>

<pallas_src>
import functools

import jax
import jax.numpy as jnp
from jax import lax
from jax.experimental import pallas as pl
from jax.experimental.pallas import tpu as pltpu


def _round_up(x, m):
    return ((x + m - 1) // m) * m


def _nice_fwd_kernel(x_ref, w1_ref, w2_ref, b1_ref, b2_ref, o_ref, *, h1):
    # x_ref: (tm, Cp) row tile.
    # w1_ref: (Cp, H1+H2) = [W~f1 | W~g1], w2_ref: (H1+H2, Cp) = [W~f2 ; W~g2]
    # b1_ref: (2, H1+H2) hidden biases, b2_ref: (2, Cp) (padded) output biases.
    x = x_ref[...].astype(jnp.float32)

    wf1 = w1_ref[:, :h1]
    wg1 = w1_ref[:, h1:]
    wf2 = w2_ref[:h1, :]
    wg2 = w2_ref[h1:, :]
    bf1 = b1_ref[0:1, :h1]
    bg1 = b1_ref[1:2, h1:]
    bf2 = b2_ref[0:1, :]
    bg2 = b2_ref[1:2, :]

    # F(x2): Linear -> ReLU -> Linear (split folded into zero-padded weights).
    h = jnp.dot(x, wf1, precision=lax.Precision.HIGHEST,
                preferred_element_type=jnp.float32) + bf1
    h = jnp.maximum(h, 0.0)
    y = x + jnp.dot(h, wf2, precision=lax.Precision.HIGHEST,
                    preferred_element_type=jnp.float32) + bf2   # = [y1, x2]

    # G(y1): Linear -> ReLU -> Linear.
    h2 = jnp.dot(y, wg1, precision=lax.Precision.HIGHEST,
                 preferred_element_type=jnp.float32) + bg1
    h2 = jnp.maximum(h2, 0.0)
    out = y + jnp.dot(h2, wg2, precision=lax.Precision.HIGHEST,
                      preferred_element_type=jnp.float32) + bg2  # = [y1, y2]

    o_ref[...] = out.astype(o_ref.dtype)


def nice_coupling_forward(x, params, *, tm_rows=8192):
    """x: (B, S, C) -> (B, S, C).  Weights stored as (in, out); biases (out,)."""
    B, S, C = x.shape
    split1 = C // 2
    M = B * S

    wf1, bf1 = params["wf1"], params["bf1"]
    wf2, bf2 = params["wf2"], params["bf2"]
    wg1, bg1 = params["wg1"], params["bg1"]
    wg2, bg2 = params["wg2"], params["bg2"]
    hf = wf1.shape[1]
    hg = wg1.shape[1]

    f32 = jnp.float32
    # Fold the channel split / scatter into zero-padded weights.
    #   F reads lanes [split1, C) of x and writes lanes [0, split1).
    #   G reads lanes [0, split1) of y and writes lanes [split1, C).
    Wf1 = jnp.zeros((C, hf), f32).at[split1:, :].set(wf1.astype(f32))
    Wf2 = jnp.zeros((hf, C), f32).at[:, :split1].set(wf2.astype(f32))
    Bf2 = jnp.zeros((C,), f32).at[:split1].set(bf2.astype(f32))
    Wg1 = jnp.zeros((C, hg), f32).at[:split1, :].set(wg1.astype(f32))
    Wg2 = jnp.zeros((hg, C), f32).at[:, split1:].set(wg2.astype(f32))
    Bg2 = jnp.zeros((C,), f32).at[split1:].set(bg2.astype(f32))
    Bf1 = bf1.astype(f32)
    Bg1 = bg1.astype(f32)

    # Lane-dense packing: fold g = 128 // C consecutive rows into one 128-lane
    # row (free metadata reshape) + block-diagonal weights, when it divides.
    g = 1
    if C < 128 and 128 % C == 0 and M % (128 // C) == 0:
        g = 128 // C
    Cp = C * g
    Mp = M // g
    if g > 1:
        eye = jnp.eye(g, dtype=f32)
        Wf1 = jnp.kron(eye, Wf1)
        Wf2 = jnp.kron(eye, Wf2)
        Wg1 = jnp.kron(eye, Wg1)
        Wg2 = jnp.kron(eye, Wg2)
        Bf1 = jnp.tile(Bf1, g)
        Bf2 = jnp.tile(Bf2, g)
        Bg1 = jnp.tile(Bg1, g)
        Bg2 = jnp.tile(Bg2, g)
    H1 = hf * g
    H2 = hg * g

    # Pack the 8 weight/bias operands into 4 constant-resident buffers.
    W1 = jnp.concatenate([Wf1, Wg1], axis=1)                    # (Cp, H1+H2)
    W2 = jnp.concatenate([Wf2, Wg2], axis=0)                    # (H1+H2, Cp)
    B1 = jnp.zeros((2, H1 + H2), f32)
    B1 = B1.at[0, :H1].set(Bf1).at[1, H1:].set(Bg1)             # (2, H1+H2)
    B2 = jnp.stack([Bf2, Bg2], axis=0)                          # (2, Cp)

    x2d = x.reshape(Mp, Cp)   # free, row-major

    # Row tile: large slab, multiple of 8; cap so the grid keeps >= 2 steps
    # (v7x megacore).  No padding: cdiv grid + masked boundary writes.
    tm_target = max(8, _round_up(max(tm_rows // g, 1), 8))
    tm = max(8, min(tm_target, _round_up(pl.cdiv(Mp, 2), 8)))
    grid = (pl.cdiv(Mp, tm),)

    itemsize = jnp.dtype(x.dtype).itemsize
    io_bytes = 2 * 2 * tm * Cp * itemsize              # double-buffered in+out
    interm_bytes = 6 * tm * Cp * 4                     # f32 working copies
    wt_bytes = 4 * (W1.size + W2.size + B1.size + B2.size)
    vmem_limit = int(min(32 << 20,
                         max(8 << 20, 2 * (io_bytes + interm_bytes + 2 * wt_bytes))))

    kernel = functools.partial(_nice_fwd_kernel, h1=H1)

    def const_spec(shape):
        return pl.BlockSpec(shape, lambda i: (0, 0))

    out2d = pl.pallas_call(
        kernel,
        out_shape=jax.ShapeDtypeStruct((Mp, Cp), x.dtype),
        grid_spec=pltpu.PrefetchScalarGridSpec(
            num_scalar_prefetch=0,
            grid=grid,
            in_specs=[
                pl.BlockSpec((tm, Cp), lambda i: (i, 0)),   # x rows
                const_spec(W1.shape),
                const_spec(W2.shape),
                const_spec(B1.shape),
                const_spec(B2.shape),
            ],
            out_specs=pl.BlockSpec((tm, Cp), lambda i: (i, 0)),
        ),
        compiler_params=pltpu.CompilerParams(
            dimension_semantics=("parallel",),
            vmem_limit_bytes=vmem_limit),
    )(x2d, W1, W2, B1, B2)

    return out2d.reshape(B, S, C)


def nice_coupling_reference(x, params):
    split1 = x.shape[-1] // 2
    x1 = x[..., :split1]
    x2 = x[..., split1:]
    f = jnp.maximum(
        jnp.dot(x2, params["wf1"], precision=lax.Precision.HIGHEST)
        + params["bf1"], 0.0)
    f = jnp.dot(f, params["wf2"], precision=lax.Precision.HIGHEST) + params["bf2"]
    y1 = x1 + f
    g = jnp.maximum(
        jnp.dot(y1, params["wg1"], precision=lax.Precision.HIGHEST)
        + params["bg1"], 0.0)
    g = jnp.dot(g, params["wg2"], precision=lax.Precision.HIGHEST) + params["bg2"]
    y2 = x2 + g
    return jnp.concatenate([y1, y2], axis=-1)


if __name__ == "__main__":
    # Small shapes consistent with the module's forward: x is (batch, seq, channels).
    B, S, C = 2, 8, 32
    reduction_factor = 2
    split1 = C // 2
    split2 = C - split1
    hf = split2 // reduction_factor      # hidden width of F
    hg = split1 // reduction_factor      # hidden width of G

    key = jax.random.PRNGKey(0)
    ks = jax.random.split(key, 10)
    x = jax.random.normal(ks[0], (B, S, C), dtype=jnp.float32)

    def linear_init(kw, kb, fan_in, fan_out):
        # nn.Linear-style uniform(-1/sqrt(fan_in), 1/sqrt(fan_in)); stored as (in, out).
        bound = 1.0 / (fan_in ** 0.5)
        w = jax.random.uniform(kw, (fan_in, fan_out), jnp.float32, -bound, bound)
        b = jax.random.uniform(kb, (fan_out,), jnp.float32, -bound, bound)
        return w, b

    wf1, bf1 = linear_init(ks[1], ks[2], split2, hf)
    wf2, bf2 = linear_init(ks[3], ks[4], hf, split1)
    wg1, bg1 = linear_init(ks[5], ks[6], split1, hg)
    wg2, bg2 = linear_init(ks[7], ks[8], hg, split2)
    params = dict(wf1=wf1, bf1=bf1, wf2=wf2, bf2=bf2,
                  wg1=wg1, bg1=bg1, wg2=wg2, bg2=bg2)

    # Primary small case.
    out = nice_coupling_forward(x, params)
    out = jax.block_until_ready(out)
    ref = nice_coupling_reference(x, params)
    assert out.shape == (B, S, C)
    max_err = jnp.max(jnp.abs(out - ref))
    assert jnp.allclose(out, ref, atol=2e-3, rtol=2e-3), f"max abs err {max_err}"

    # Secondary check: multiple grid steps + partial (unpadded) last block.
    B2_, S2_ = 4, 520
    x_big = jax.random.normal(ks[9], (B2_, S2_, C), dtype=jnp.float32)
    out_big = jax.block_until_ready(nice_coupling_forward(x_big, params))
    ref_big = nice_coupling_reference(x_big, params)
    max_err_big = jnp.max(jnp.abs(out_big - ref_big))
    assert jnp.allclose(out_big, ref_big, atol=2e-3, rtol=2e-3), \
        f"max abs err {max_err_big}"

    print("KERNEL_OK")
</pallas_src>

<mosaic_0001>
module attributes {stable_mosaic.version = 11 : i64} {
  func.func @_nice_fwd_kernel(%arg0: i32, %arg1: memref<8x128xf32, #tpu.memory_space<vmem>>, %arg2: memref<128x64xf32, #tpu.memory_space<vmem>>, %arg3: memref<64x128xf32, #tpu.memory_space<vmem>>, %arg4: memref<2x64xf32, #tpu.memory_space<vmem>>, %arg5: memref<2x128xf32, #tpu.memory_space<vmem>>, %arg6: memref<8x128xf32, #tpu.memory_space<vmem>>) attributes {dimension_semantics = [#tpu.dimension_semantics<parallel>], iteration_bounds = array<i64: 1>, scalar_prefetch = 0 : i64, scratch_operands = 0 : i64, tpu.core_type = #tpu.core_type<tc>, window_params = [{transform_indices = @transform_0, window_bounds = array<i64: 8, 128>}, {pipeline_mode = #tpu.pipeline_mode<synchronous>, transform_indices = @transform_1, window_bounds = array<i64: 128, 64>}, {pipeline_mode = #tpu.pipeline_mode<synchronous>, transform_indices = @transform_2, window_bounds = array<i64: 64, 128>}, {pipeline_mode = #tpu.pipeline_mode<synchronous>, transform_indices = @transform_3, window_bounds = array<i64: 2, 64>}, {pipeline_mode = #tpu.pipeline_mode<synchronous>, transform_indices = @transform_4, window_bounds = array<i64: 2, 128>}, {transform_indices = @transform_5, window_bounds = array<i64: 8, 128>}]} {
    %c0 = arith.constant 0 : index
    %c0_0 = arith.constant 0 : index
    %0 = vector.load %arg1[%c0, %c0_0] : memref<8x128xf32, #tpu.memory_space<vmem>>, vector<8x128xf32>
    %c0_1 = arith.constant 0 : index
    %c0_2 = arith.constant 0 : index
    %1 = vector.load %arg2[%c0_1, %c0_2] : memref<128x64xf32, #tpu.memory_space<vmem>>, vector<128x32xf32>
    %c0_3 = arith.constant 0 : index
    %c32 = arith.constant 32 : index
    %2 = vector.load %arg2[%c0_3, %c32] : memref<128x64xf32, #tpu.memory_space<vmem>>, vector<128x32xf32>
    %c0_4 = arith.constant 0 : index
    %c0_5 = arith.constant 0 : index
    %3 = vector.load %arg3[%c0_4, %c0_5] : memref<64x128xf32, #tpu.memory_space<vmem>>, vector<32x128xf32>
    %c32_6 = arith.constant 32 : index
    %c0_7 = arith.constant 0 : index
    %4 = vector.load %arg3[%c32_6, %c0_7] : memref<64x128xf32, #tpu.memory_space<vmem>>, vector<32x128xf32>
    %c0_8 = arith.constant 0 : index
    %c0_9 = arith.constant 0 : index
    %5 = vector.load %arg4[%c0_8, %c0_9] : memref<2x64xf32, #tpu.memory_space<vmem>>, vector<1x32xf32>
    %c1 = arith.constant 1 : index
    %c32_10 = arith.constant 32 : index
    %6 = vector.load %arg4[%c1, %c32_10] : memref<2x64xf32, #tpu.memory_space<vmem>>, vector<1x32xf32>
    %c0_11 = arith.constant 0 : index
    %c0_12 = arith.constant 0 : index
    %7 = vector.load %arg5[%c0_11, %c0_12] : memref<2x128xf32, #tpu.memory_space<vmem>>, vector<1x128xf32>
    %c1_13 = arith.constant 1 : index
    %c0_14 = arith.constant 0 : index
    %8 = vector.load %arg5[%c1_13, %c0_14] : memref<2x128xf32, #tpu.memory_space<vmem>>, vector<1x128xf32>
    %cst = arith.constant dense<0.000000e+00> : vector<8x32xf32>
    %9 = tpu.matmul %0, %1, %cst {dimension_numbers = #tpu.dot_dimension_numbers<[1], [0], [0], [1], [0, 0, 1, 1], [], []>, precision = #tpu.contract_precision<fp32>} : vector<8x128xf32>, vector<128x32xf32>, vector<8x32xf32> -> vector<8x32xf32>
    %10 = vector.broadcast %5 : vector<1x32xf32> to vector<8x32xf32>
    %11 = arith.addf %9, %10 : vector<8x32xf32>
    %cst_15 = arith.constant 0.000000e+00 : f32
    %12 = vector.broadcast %cst_15 : f32 to vector<8x32xf32>
    %13 = arith.maximumf %11, %12 : vector<8x32xf32>
    %cst_16 = arith.constant dense<0.000000e+00> : vector<8x128xf32>
    %14 = tpu.matmul %13, %3, %cst_16 {dimension_numbers = #tpu.dot_dimension_numbers<[1], [0], [0], [1], [0, 0, 1, 1], [], []>, precision = #tpu.contract_precision<fp32>} : vector<8x32xf32>, vector<32x128xf32>, vector<8x128xf32> -> vector<8x128xf32>
    %15 = arith.addf %0, %14 : vector<8x128xf32>
    %16 = vector.broadcast %7 : vector<1x128xf32> to vector<8x128xf32>
    %17 = arith.addf %15, %16 : vector<8x128xf32>
    %cst_17 = arith.constant dense<0.000000e+00> : vector<8x32xf32>
    %18 = tpu.matmul %17, %2, %cst_17 {dimension_numbers = #tpu.dot_dimension_numbers<[1], [0], [0], [1], [0, 0, 1, 1], [], []>, precision = #tpu.contract_precision<fp32>} : vector<8x128xf32>, vector<128x32xf32>, vector<8x32xf32> -> vector<8x32xf32>
    %19 = vector.broadcast %6 : vector<1x32xf32> to vector<8x32xf32>
    %20 = arith.addf %18, %19 : vector<8x32xf32>
    %cst_18 = arith.constant 0.000000e+00 : f32
    %21 = vector.broadcast %cst_18 : f32 to vector<8x32xf32>
    %22 = arith.maximumf %20, %21 : vector<8x32xf32>
    %cst_19 = arith.constant dense<0.000000e+00> : vector<8x128xf32>
    %23 = tpu.matmul %22, %4, %cst_19 {dimension_numbers = #tpu.dot_dimension_numbers<[1], [0], [0], [1], [0, 0, 1, 1], [], []>, precision = #tpu.contract_precision<fp32>} : vector<8x32xf32>, vector<32x128xf32>, vector<8x128xf32> -> vector<8x128xf32>
    %24 = arith.addf %17, %23 : vector<8x128xf32>
    %25 = vector.broadcast %8 : vector<1x128xf32> to vector<8x128xf32>
    %26 = arith.addf %24, %25 : vector<8x128xf32>
    %c0_20 = arith.constant 0 : index
    %c0_21 = arith.constant 0 : index
    %27 = vector.load %arg6[%c0_20, %c0_21] : memref<8x128xf32, #tpu.memory_space<vmem>>, vector<8x128xf32>
    tpu.vector_store %arg6[%c0_20, %c0_21], %26 {strides = array<i32>} : memref<8x128xf32, #tpu.memory_space<vmem>>, vector<8x128xf32>,
    return
  }
  func.func @transform_0(%arg0: i32) -> (i32, i32) {
    %c0_i32 = arith.constant 0 : i32
    %c0_i32_0 = arith.constant 0 : i32
    return %arg0, %c0_i32 : i32, i32
  }
  func.func @transform_1(%arg0: i32) -> (i32, i32) {
    %c0_i32 = arith.constant 0 : i32
    %c0_i32_0 = arith.constant 0 : i32
    %c0_i32_1 = arith.constant 0 : i32
    return %c0_i32, %c0_i32_0 : i32, i32
  }
  func.func @transform_2(%arg0: i32) -> (i32, i32) {
    %c0_i32 = arith.constant 0 : i32
    %c0_i32_0 = arith.constant 0 : i32
    %c0_i32_1 = arith.constant 0 : i32
    return %c0_i32, %c0_i32_0 : i32, i32
  }
  func.func @transform_3(%arg0: i32) -> (i32, i32) {
    %c0_i32 = arith.constant 0 : i32
    %c0_i32_0 = arith.constant 0 : i32
    %c0_i32_1 = arith.constant 0 : i32
    return %c0_i32, %c0_i32_0 : i32, i32
  }
  func.func @transform_4(%arg0: i32) -> (i32, i32) {
    %c0_i32 = arith.constant 0 : i32
    %c0_i32_0 = arith.constant 0 : i32
    %c0_i32_1 = arith.constant 0 : i32
    return %c0_i32, %c0_i32_0 : i32, i32
  }
  func.func @transform_5(%arg0: i32) -> (i32, i32) {
    %c0_i32 = arith.constant 0 : i32
    %c0_i32_0 = arith.constant 0 : i32
    return %arg0, %c0_i32 : i32, i32
  }
}

</mosaic_0001>

<llo_original>
// kernel: tpu_custom_call.1
$region0: #{tpu_custom_call.1}
  #allocation0 [shape = 'u32[]', space=smem, size = 0x4, offset = 0x4, fixed_abs, tag = 'smem constant byte address 0x4 - core index']
  #allocation1 [shape = 'u32[72,128]{1,0:T(1,128)}', space=vmem, size = 0x9000, scoped, tag = 'internal scratch']
  %s0 = inlined_call_operand.vmem [shape: f32[4,128], index: 0, kind: input, shape index: {}]
  %s1 = inlined_call_operand.vmem [shape: f32[128,64], index: 1, kind: input, shape index: {}]
  %s2 = inlined_call_operand.vmem [shape: f32[64,128], index: 2, kind: input, shape index: {}]
  %s3 = inlined_call_operand.vmem [shape: f32[2,64], index: 3, kind: input, shape index: {}]
  %s4 = inlined_call_operand.vmem [shape: f32[2,128], index: 4, kind: input, shape index: {}]
  %s5 = inlined_call_operand.hbm [shape: f32[4,128], index: 5, kind: output, shape index: {}]
  %s6 = sld [smem:[#allocation0]]
  $region30: #{tpu_custom_call.1} parent=0
    _
  %s8 = ssub.s32 1, %s6
  %s9 = scalar_select 0, %s8, %s6
  $region1: #{tpu_custom_call.1} parent=0
    #allocation2 [shape = 'u8[4096]{0}', space=vmem, size = 0x1000, scoped, tag = 'output window, operand 0, single buffered']
    #allocation3 [shape = 's32[1]{0}', space=sflag, size = 0x4, scoped, tag = 'scoped memory for tpu_custom_call.1']
    %10 = vsyncpa [#allocation3], 0
    // Predicated region
    $region2: #{tpu_custom_call.1} parent=1 // pred_check
      _
    $region3: #{tpu_custom_call.1} parent=1 // pred_check_branch
      %12 = sbr.rel (0) target = $region5
    $region4: #{tpu_custom_call.1} parent=1 // pred_region
      _
    $region5: #{tpu_custom_call.1} parent=1 // pred_fallthru
      _
    // Predicated region
    $region6: #{tpu_custom_call.1} parent=1 // pred_check
      _
    $region7: #{tpu_custom_call.1} parent=1 // pred_check_branch
      %14 = sbr.rel (0) target = $region9
    $region8: #{tpu_custom_call.1} parent=1 // pred_region
      _
    $region9: #{tpu_custom_call.1} parent=1 // pred_fallthru
      _
    // Predicated region
    $region10: #{tpu_custom_call.1} parent=1 // pred_check
      _
    $region11: #{tpu_custom_call.1} parent=1 // pred_check_branch
      %16 = sbr.rel (0) target = $region13
    $region12: #{tpu_custom_call.1} parent=1 // pred_region
      _
    $region13: #{tpu_custom_call.1} parent=1 // pred_fallthru
      _
    // Predicated region
    $region14: #{tpu_custom_call.1} parent=1 // pred_check
      _
    $region15: #{tpu_custom_call.1} parent=1 // pred_check_branch
      %18 = sbr.rel (0) target = $region17
    $region16: #{tpu_custom_call.1} parent=1 // pred_region
      _
    $region17: #{tpu_custom_call.1} parent=1 // pred_fallthru
      _
    // Predicated region
    $region18: #{tpu_custom_call.1} parent=1 // pred_check
      _
    $region19: #{tpu_custom_call.1} parent=1 // pred_check_branch
      %20 = sbr.rel (0) target = $region21
    $region20: #{tpu_custom_call.1} parent=1 // pred_region
      _
    $region21: #{tpu_custom_call.1} parent=1 // pred_fallthru
      _
    %v21 = vld [vmem:[%s0] sm:$0xff]
    %v22 = vld [vmem:[%s1] sm:$0xff]
    %v23 = vld [vmem:[%s1 + $0x8] sm:$0xff]
    %v24 = vld [vmem:[%s1 + $0x10] sm:$0xff]
    %v25 = vld [vmem:[%s1 + $0x18] sm:$0xff]
    %v26 = vld [vmem:[%s1 + $0x20] sm:$0xff]
    %v27 = vld [vmem:[%s1 + $0x28] sm:$0xff]
    %v28 = vld [vmem:[%s1 + $0x30] sm:$0xff]
    %v29 = vld [vmem:[%s1 + $0x38] sm:$0xff]
    %v30 = vld [vmem:[%s1 + $0x40] sm:$0xff]
    %v31 = vld [vmem:[%s1 + $0x48] sm:$0xff]
    %v32 = vld [vmem:[%s1 + $0x50] sm:$0xff]
    %v33 = vld [vmem:[%s1 + $0x58] sm:$0xff]
    %v34 = vld [vmem:[%s1 + $0x60] sm:$0xff]
    %v35 = vld [vmem:[%s1 + $0x68] sm:$0xff]
    %v36 = vld [vmem:[%s1 + $0x70] sm:$0xff]
    %v37 = vld [vmem:[%s1 + $0x78] sm:$0xff]
    %v38 = vld [vmem:[%s2] sm:$0xff]
    %v39 = vld [vmem:[%s2 + $0x8] sm:$0xff]
    %v40 = vld [vmem:[%s2 + $0x10] sm:$0xff]
    %v41 = vld [vmem:[%s2 + $0x18] sm:$0xff]
    %v42 = vld [vmem:[%s2 + $0x20] sm:$0xff]
    %v43 = vld [vmem:[%s2 + $0x28] sm:$0xff]
    %v44 = vld [vmem:[%s2 + $0x30] sm:$0xff]
    %v45 = vld [vmem:[%s2 + $0x38] sm:$0xff]
    %v46 = vld [vmem:[%s3] sm:$0x1]
    %v47 = vld [vmem:[%s3 + $0x1] sm:$0x1]
    %v48 = vld [vmem:[%s4] sm:$0x1]
    %v49 = vld [vmem:[%s4 + $0x1] sm:$0x1]
    %v50 = vperm.slane %v46, 0
    %v51 = vand.u32 %v37, 4294901760
    %52 = vmatpush.msra.mxu0 %v51
    %v53 = vand.u32 %v36, 4294901760
    %54 = vmatpush.msra.mxu0 %v53
    %v55 = vand.u32 %v35, 4294901760
    %56 = vmatpush.msra.mxu0 %v55
    %v57 = vand.u32 %v34, 4294901760
    %58 = vmatpush.msra.mxu0 %v57
    %v59 = vand.u32 %v33, 4294901760
    %60 = vmatpush.msra.mxu0 %v59
    %v61 = vand.u32 %v32, 4294901760
    %62 = vmatpush.msra.mxu0 %v61
    %v63 = vand.u32 %v31, 4294901760
    %64 = vmatpush.msra.mxu0 %v63
    %v65 = vand.u32 %v30, 4294901760
    %66 = vmatpush.msra.mxu0 %v65
    %v67 = vand.u32 %v29, 4294901760
    %68 = vmatpush.msra.mxu0 %v67
    %v69 = vand.u32 %v28, 4294901760
    %70 = vmatpush.msra.mxu0 %v69
    %v71 = vand.u32 %v27, 4294901760
    %72 = vmatpush.msra.mxu0 %v71
    %v73 = vand.u32 %v26, 4294901760
    %74 = vmatpush.msra.mxu0 %v73
    %v75 = vand.u32 %v25, 4294901760
    %76 = vmatpush.msra.mxu0 %v75
    %v77 = vand.u32 %v24, 4294901760
    %78 = vmatpush.msra.mxu0 %v77
    %v79 = vand.u32 %v23, 4294901760
    %80 = vmatpush.msra.mxu0 %v79
    %v81 = vand.u32 %v22, 4294901760
    %82 = vmatpush.msra.mxu0 %v81
    %v83 = vand.u32 %v21, 4294901760
    %v84 = vsub.f32 %v21, %v83
    %v85 = vand.u32 %v84, 4294901760
    %v86 = vsub.f32 %v84, %v85
    %v87 = vand.u32 %v86, 4294901760
    %88 = vmatmul.f32.gmra.mxu0 %v87
    %v89 = vpop.f32.mrf.mxu0
    %v90 = vadd.f32 %v50, %v89
    %91 = vdwg.mxu0
    %v92 = vand.u32 %v37, 4294901760
    %v93 = vsub.f32 %v37, %v92
    %v94 = vand.u32 %v93, 4294901760
    %v95 = vsub.f32 %v93, %v94
    %v96 = vand.u32 %v95, 4294901760
    %97 = vmatpush.msra.mxu0 %v96
    %v98 = vand.u32 %v36, 4294901760
    %v99 = vsub.f32 %v36, %v98
    %v100 = vand.u32 %v99, 4294901760
    %v101 = vsub.f32 %v99, %v100
    %v102 = vand.u32 %v101, 4294901760
    %103 = vmatpush.msra.mxu0 %v102
    %v104 = vand.u32 %v35, 4294901760
    %v105 = vsub.f32 %v35, %v104
    %v106 = vand.u32 %v105, 4294901760
    %v107 = vsub.f32 %v105, %v106
    %v108 = vand.u32 %v107, 4294901760
    %109 = vmatpush.msra.mxu0 %v108
    %v110 = vand.u32 %v34, 4294901760
    %v111 = vsub.f32 %v34, %v110
    %v112 = vand.u32 %v111, 4294901760
    %v113 = vsub.f32 %v111, %v112
    %v114 = vand.u32 %v113, 4294901760
    %115 = vmatpush.msra.mxu0 %v114
    %v116 = vand.u32 %v33, 4294901760
    %v117 = vsub.f32 %v33, %v116
    %v118 = vand.u32 %v117, 4294901760
    %v119 = vsub.f32 %v117, %v118
    %v120 = vand.u32 %v119, 4294901760
    %121 = vmatpush.msra.mxu0 %v120
    %v122 = vand.u32 %v32, 4294901760
    %v123 = vsub.f32 %v32, %v122
    %v124 = vand.u32 %v123, 4294901760
    %v125 = vsub.f32 %v123, %v124
    %v126 = vand.u32 %v125, 4294901760
    %127 = vmatpush.msra.mxu0 %v126
    %v128 = vand.u32 %v31, 4294901760
    %v129 = vsub.f32 %v31, %v128
    %v130 = vand.u32 %v129, 4294901760
    %v131 = vsub.f32 %v129, %v130
    %v132 = vand.u32 %v131, 4294901760
    %133 = vmatpush.msra.mxu0 %v132
    %v134 = vand.u32 %v30, 4294901760
    %v135 = vsub.f32 %v30, %v134
    %v136 = vand.u32 %v135, 4294901760
    %v137 = vsub.f32 %v135, %v136
    %v138 = vand.u32 %v137, 4294901760
    %139 = vmatpush.msra.mxu0 %v138
    %v140 = vand.u32 %v29, 4294901760
    %v141 = vsub.f32 %v29, %v140
    %v142 = vand.u32 %v141, 4294901760
    %v143 = vsub.f32 %v141, %v142
    %v144 = vand.u32 %v143, 4294901760
    %145 = vmatpush.msra.mxu0 %v144
    %v146 = vand.u32 %v28, 4294901760
    %v147 = vsub.f32 %v28, %v146
    %v148 = vand.u32 %v147, 4294901760
    %v149 = vsub.f32 %v147, %v148
    %v150 = vand.u32 %v149, 4294901760
    %151 = vmatpush.msra.mxu0 %v150
    %v152 = vand.u32 %v27, 4294901760
    %v153 = vsub.f32 %v27, %v152
    %v154 = vand.u32 %v153, 4294901760
    %v155 = vsub.f32 %v153, %v154
    %v156 = vand.u32 %v155, 4294901760
    %157 = vmatpush.msra.mxu0 %v156
    %v158 = vand.u32 %v26, 4294901760
    %v159 = vsub.f32 %v26, %v158
    %v160 = vand.u32 %v159, 4294901760
    %v161 = vsub.f32 %v159, %v160
    %v162 = vand.u32 %v161, 4294901760
    %163 = vmatpush.msra.mxu0 %v162
    %v164 = vand.u32 %v25, 4294901760
    %v165 = vsub.f32 %v25, %v164
    %v166 = vand.u32 %v165, 4294901760
    %v167 = vsub.f32 %v165, %v166
    %v168 = vand.u32 %v167, 4294901760
    %169 = vmatpush.msra.mxu0 %v168
    %v170 = vand.u32 %v24, 4294901760
    %v171 = vsub.f32 %v24, %v170
    %v172 = vand.u32 %v171, 4294901760
    %v173 = vsub.f32 %v171, %v172
    %v174 = vand.u32 %v173, 4294901760
    %175 = vmatpush.msra.mxu0 %v174
    %v176 = vand.u32 %v23, 4294901760
    %v177 = vsub.f32 %v23, %v176
    %v178 = vand.u32 %v177, 4294901760
    %v179 = vsub.f32 %v177, %v178
    %v180 = vand.u32 %v179, 4294901760
    %181 = vmatpush.msra.mxu0 %v180
    %v182 = vand.u32 %v22, 4294901760
    %v183 = vsub.f32 %v22, %v182
    %v184 = vand.u32 %v183, 4294901760
    %v185 = vsub.f32 %v183, %v184
    %v186 = vand.u32 %v185, 4294901760
    %187 = vmatpush.msra.mxu0 %v186
    %v188 = vand.u32 %v21, 4294901760
    %189 = vmatmul.f32.gmra.mxu0 %v188
    %v190 = vpop.f32.mrf.mxu0
    %v191 = vadd.f32 %v90, %v190
    %192 = vdwg.mxu0
    %v193 = vand.u32 %v37, 4294901760
    %v194 = vsub.f32 %v37, %v193
    %195 = vmatpush.msra.mxu0 %v194
    %v196 = vand.u32 %v36, 4294901760
    %v197 = vsub.f32 %v36, %v196
    %198 = vmatpush.msra.mxu0 %v197
    %v199 = vand.u32 %v35, 4294901760
    %v200 = vsub.f32 %v35, %v199
    %201 = vmatpush.msra.mxu0 %v200
    %v202 = vand.u32 %v34, 4294901760
    %v203 = vsub.f32 %v34, %v202
    %204 = vmatpush.msra.mxu0 %v203
    %v205 = vand.u32 %v33, 4294901760
    %v206 = vsub.f32 %v33, %v205
    %207 = vmatpush.msra.mxu0 %v206
    %v208 = vand.u32 %v32, 4294901760
    %v209 = vsub.f32 %v32, %v208
    %210 = vmatpush.msra.mxu0 %v209
    %v211 = vand.u32 %v31, 4294901760
    %v212 = vsub.f32 %v31, %v211
    %213 = vmatpush.msra.mxu0 %v212
    %v214 = vand.u32 %v30, 4294901760
    %v215 = vsub.f32 %v30, %v214
    %216 = vmatpush.msra.mxu0 %v215
    %v217 = vand.u32 %v29, 4294901760
    %v218 = vsub.f32 %v29, %v217
    %219 = vmatpush.msra.mxu0 %v218
    %v220 = vand.u32 %v28, 4294901760
    %v221 = vsub.f32 %v28, %v220
    %222 = vmatpush.msra.mxu0 %v221
    %v223 = vand.u32 %v27, 4294901760
    %v224 = vsub.f32 %v27, %v223
    %225 = vmatpush.msra.mxu0 %v224
    %v226 = vand.u32 %v26, 4294901760
    %v227 = vsub.f32 %v26, %v226
    %228 = vmatpush.msra.mxu0 %v227
    %v229 = vand.u32 %v25, 4294901760
    %v230 = vsub.f32 %v25, %v229
    %231 = vmatpush.msra.mxu0 %v230
    %v232 = vand.u32 %v24, 4294901760
    %v233 = vsub.f32 %v24, %v232
    %234 = vmatpush.msra.mxu0 %v233
    %v235 = vand.u32 %v23, 4294901760
    %v236 = vsub.f32 %v23, %v235
    %237 = vmatpush.msra.mxu0 %v236
    %v238 = vand.u32 %v22, 4294901760
    %v239 = vsub.f32 %v22, %v238
    %240 = vmatpush.msra.mxu0 %v239
    %v241 = vand.u32 %v21, 4294901760
    %v242 = vsub.f32 %v21, %v241
    %243 = vmatmul.f32.gmra.mxu0 %v242
    %v244 = vpop.f32.mrf.mxu0
    %v245 = vadd.f32 %v191, %v244
    %246 = vdwg.mxu0
    %v247 = vand.u32 %v37, 4294901760
    %248 = vmatpush.msra.mxu0 %v247
    %v249 = vand.u32 %v36, 4294901760
    %250 = vmatpush.msra.mxu0 %v249
    %v251 = vand.u32 %v35, 4294901760
    %252 = vmatpush.msra.mxu0 %v251
    %v253 = vand.u32 %v34, 4294901760
    %254 = vmatpush.msra.mxu0 %v253
    %v255 = vand.u32 %v33, 4294901760
    %256 = vmatpush.msra.mxu0 %v255
    %v257 = vand.u32 %v32, 4294901760
    %258 = vmatpush.msra.mxu0 %v257
    %v259 = vand.u32 %v31, 4294901760
    %260 = vmatpush.msra.mxu0 %v259
    %v261 = vand.u32 %v30, 4294901760
    %262 = vmatpush.msra.mxu0 %v261
    %v263 = vand.u32 %v29, 4294901760
    %264 = vmatpush.msra.mxu0 %v263
    %v265 = vand.u32 %v28, 4294901760
    %266 = vmatpush.msra.mxu0 %v265
    %v267 = vand.u32 %v27, 4294901760
    %268 = vmatpush.msra.mxu0 %v267
    %v269 = vand.u32 %v26, 4294901760
    %270 = vmatpush.msra.mxu0 %v269
    %v271 = vand.u32 %v25, 4294901760
    %272 = vmatpush.msra.mxu0 %v271
    %v273 = vand.u32 %v24, 4294901760
    %274 = vmatpush.msra.mxu0 %v273
    %v275 = vand.u32 %v23, 4294901760
    %276 = vmatpush.msra.mxu0 %v275
    %v277 = vand.u32 %v22, 4294901760
    %278 = vmatpush.msra.mxu0 %v277
    %v279 = vand.u32 %v21, 4294901760
    %v280 = vsub.f32 %v21, %v279
    %v281 = vand.u32 %v280, 4294901760
    %282 = vmatmul.f32.gmra.mxu0 %v281
    %v283 = vpop.f32.mrf.mxu0
    %v284 = vadd.f32 %v245, %v283
    %285 = vdwg.mxu0
    %v286 = vand.u32 %v37, 4294901760
    %v287 = vsub.f32 %v37, %v286
    %v288 = vand.u32 %v287, 4294901760
    %289 = vmatpush.msra.mxu0 %v288
    %v290 = vand.u32 %v36, 4294901760
    %v291 = vsub.f32 %v36, %v290
    %v292 = vand.u32 %v291, 4294901760
    %293 = vmatpush.msra.mxu0 %v292
    %v294 = vand.u32 %v35, 4294901760
    %v295 = vsub.f32 %v35, %v294
    %v296 = vand.u32 %v295, 4294901760
    %297 = vmatpush.msra.mxu0 %v296
    %v298 = vand.u32 %v34, 4294901760
    %v299 = vsub.f32 %v34, %v298
    %v300 = vand.u32 %v299, 4294901760
    %301 = vmatpush.msra.mxu0 %v300
    %v302 = vand.u32 %v33, 4294901760
    %v303 = vsub.f32 %v33, %v302
    %v304 = vand.u32 %v303, 4294901760
    %305 = vmatpush.msra.mxu0 %v304
    %v306 = vand.u32 %v32, 4294901760
    %v307 = vsub.f32 %v32, %v306
    %v308 = vand.u32 %v307, 4294901760
    %309 = vmatpush.msra.mxu0 %v308
    %v310 = vand.u32 %v31, 4294901760
    %v311 = vsub.f32 %v31, %v310
    %v312 = vand.u32 %v311, 4294901760
    %313 = vmatpush.msra.mxu0 %v312
    %v314 = vand.u32 %v30, 4294901760
    %v315 = vsub.f32 %v30, %v314
    %v316 = vand.u32 %v315, 4294901760
    %317 = vmatpush.msra.mxu0 %v316
    %v318 = vand.u32 %v29, 4294901760
    %v319 = vsub.f32 %v29, %v318
    %v320 = vand.u32 %v319, 4294901760
    %321 = vmatpush.msra.mxu0 %v320
    %v322 = vand.u32 %v28, 4294901760
    %v323 = vsub.f32 %v28, %v322
    %v324 = vand.u32 %v323, 4294901760
    %325 = vmatpush.msra.mxu0 %v324
    %v326 = vand.u32 %v27, 4294901760
    %v327 = vsub.f32 %v27, %v326
    %v328 = vand.u32 %v327, 4294901760
    %329 = vmatpush.msra.mxu0 %v328
    %v330 = vand.u32 %v26, 4294901760
    %v331 = vsub.f32 %v26, %v330
    %v332 = vand.u32 %v331, 4294901760
    %333 = vmatpush.msra.mxu0 %v332
    %v334 = vand.u32 %v25, 4294901760
    %v335 = vsub.f32 %v25, %v334
    %v336 = vand.u32 %v335, 4294901760
    %337 = vmatpush.msra.mxu0 %v336
    %v338 = vand.u32 %v24, 4294901760
    %v339 = vsub.f32 %v24, %v338
    %v340 = vand.u32 %v339, 4294901760
    %341 = vmatpush.msra.mxu0 %v340
    %v342 = vand.u32 %v23, 4294901760
    %v343 = vsub.f32 %v23, %v342
    %v344 = vand.u32 %v343, 4294901760
    %345 = vmatpush.msra.mxu0 %v344
    %v346 = vand.u32 %v22, 4294901760
    %v347 = vsub.f32 %v22, %v346
    %v348 = vand.u32 %v347, 4294901760
    %349 = vmatpush.msra.mxu0 %v348
    %v350 = vand.u32 %v21, 4294901760
    %351 = vmatmul.f32.gmra.mxu0 %v350
    %v352 = vpop.f32.mrf.mxu0
    %v353 = vadd.f32 %v284, %v352
    %354 = vdwg.mxu0
    %v355 = vand.u32 %v37, 4294901760
    %356 = vmatpush.msra.mxu0 %v355
    %v357 = vand.u32 %v36, 4294901760
    %358 = vmatpush.msra.mxu0 %v357
    %v359 = vand.u32 %v35, 4294901760
    %360 = vmatpush.msra.mxu0 %v359
    %v361 = vand.u32 %v34, 4294901760
    %362 = vmatpush.msra.mxu0 %v361
    %v363 = vand.u32 %v33, 4294901760
    %364 = vmatpush.msra.mxu0 %v363
    %v365 = vand.u32 %v32, 4294901760
    %366 = vmatpush.msra.mxu0 %v365
    %v367 = vand.u32 %v31, 4294901760
    %368 = vmatpush.msra.mxu0 %v367
    %v369 = vand.u32 %v30, 4294901760
    %370 = vmatpush.msra.mxu0 %v369
    %v371 = vand.u32 %v29, 4294901760
    %372 = vmatpush.msra.mxu0 %v371
    %v373 = vand.u32 %v28, 4294901760
    %374 = vmatpush.msra.mxu0 %v373
    %v375 = vand.u32 %v27, 4294901760
    %376 = vmatpush.msra.mxu0 %v375
    %v377 = vand.u32 %v26, 4294901760
    %378 = vmatpush.msra.mxu0 %v377
    %v379 = vand.u32 %v25, 4294901760
    %380 = vmatpush.msra.mxu0 %v379
    %v381 = vand.u32 %v24, 4294901760
    %382 = vmatpush.msra.mxu0 %v381
    %v383 = vand.u32 %v23, 4294901760
    %384 = vmatpush.msra.mxu0 %v383
    %v385 = vand.u32 %v22, 4294901760
    %386 = vmatpush.msra.mxu0 %v385
    %v387 = vand.u32 %v21, 4294901760
    %388 = vmatmul.f32.gmra.mxu0 %v387
    %v389 = vpop.f32.mrf.mxu0
    %v390 = vadd.f32 %v353, %v389
    %391 = vdwg.mxu0
    %v392 = vmax.f32 %v390, 0.0
    %vm393 = vcmask 261120
    %v395 = vsel %vm393, %v392, 0
    %397 = vmatpush.msra.mxu0 0.0
    %398 = vmatpush.msra.mxu0 0.0
    %399 = vmatpush.msra.mxu0 0.0
    %400 = vmatpush.msra.mxu0 0.0
    %401 = vmatpush.msra.mxu0 0.0
    %402 = vmatpush.msra.mxu0 0.0
    %403 = vmatpush.msra.mxu0 0.0
    %404 = vmatpush.msra.mxu0 0.0
    %405 = vmatpush.msra.mxu0 0.0
    %406 = vmatpush.msra.mxu0 0.0
    %407 = vmatpush.msra.mxu0 0.0
    %408 = vmatpush.msra.mxu0 0.0
    %v409 = vand.u32 %v41, 4294901760
    %410 = vmatpush.msra.mxu0 %v409
    %v411 = vand.u32 %v40, 4294901760
    %412 = vmatpush.msra.mxu0 %v411
    %v413 = vand.u32 %v39, 4294901760
    %414 = vmatpush.msra.mxu0 %v413
    %v415 = vand.u32 %v38, 4294901760
    %416 = vmatpush.msra.mxu0 %v415
    %v417 = vand.u32 %v395, 4294901760
    %v418 = vsub.f32 %v395, %v417
    %v419 = vand.u32 %v418, 4294901760
    %v420 = vsub.f32 %v418, %v419
    %v421 = vand.u32 %v420, 4294901760
    %422 = vmatmul.f32.gmra.mxu0 %v421
    %v423 = vpop.f32.mrf.mxu0
    %v424 = vadd.f32 0.0, %v423
    %425 = vdwg.mxu0
    %426 = vmatpush.msra.mxu0 0.0
    %427 = vmatpush.msra.mxu0 0.0
    %428 = vmatpush.msra.mxu0 0.0
    %429 = vmatpush.msra.mxu0 0.0
    %430 = vmatpush.msra.mxu0 0.0
    %431 = vmatpush.msra.mxu0 0.0
    %432 = vmatpush.msra.mxu0 0.0
    %433 = vmatpush.msra.mxu0 0.0
    %434 = vmatpush.msra.mxu0 0.0
    %435 = vmatpush.msra.mxu0 0.0
    %436 = vmatpush.msra.mxu0 0.0
    %437 = vmatpush.msra.mxu0 0.0
    %v438 = vand.u32 %v41, 4294901760
    %v439 = vsub.f32 %v41, %v438
    %v440 = vand.u32 %v439, 4294901760
    %v441 = vsub.f32 %v439, %v440
    %v442 = vand.u32 %v441, 4294901760
    %443 = vmatpush.msra.mxu0 %v442
    %v444 = vand.u32 %v40, 4294901760
    %v445 = vsub.f32 %v40, %v444
    %v446 = vand.u32 %v445, 4294901760
    %v447 = vsub.f32 %v445, %v446
    %v448 = vand.u32 %v447, 4294901760
    %449 = vmatpush.msra.mxu0 %v448
    %v450 = vand.u32 %v39, 4294901760
    %v451 = vsub.f32 %v39, %v450
    %v452 = vand.u32 %v451, 4294901760
    %v453 = vsub.f32 %v451, %v452
    %v454 = vand.u32 %v453, 4294901760
    %455 = vmatpush.msra.mxu0 %v454
    %v456 = vand.u32 %v38, 4294901760
    %v457 = vsub.f32 %v38, %v456
    %v458 = vand.u32 %v457, 4294901760
    %v459 = vsub.f32 %v457, %v458
    %v460 = vand.u32 %v459, 4294901760
    %461 = vmatpush.msra.mxu0 %v460
    %v462 = vand.u32 %v395, 4294901760
    %463 = vmatmul.f32.gmra.mxu0 %v462
    %v464 = vpop.f32.mrf.mxu0
    %v465 = vadd.f32 %v424, %v464
    %466 = vdwg.mxu0
    %467 = vmatpush.msra.mxu0 0.0
    %468 = vmatpush.msra.mxu0 0.0
    %469 = vmatpush.msra.mxu0 0.0
    %470 = vmatpush.msra.mxu0 0.0
    %471 = vmatpush.msra.mxu0 0.0
    %472 = vmatpush.msra.mxu0 0.0
    %473 = vmatpush.msra.mxu0 0.0
    %474 = vmatpush.msra.mxu0 0.0
    %475 = vmatpush.msra.mxu0 0.0
    %476 = vmatpush.msra.mxu0 0.0
    %477 = vmatpush.msra.mxu0 0.0
    %478 = vmatpush.msra.mxu0 0.0
    %v479 = vand.u32 %v41, 4294901760
    %v480 = vsub.f32 %v41, %v479
    %481 = vmatpush.msra.mxu0 %v480
    %v482 = vand.u32 %v40, 4294901760
    %v483 = vsub.f32 %v40, %v482
    %484 = vmatpush.msra.mxu0 %v483
    %v485 = vand.u32 %v39, 4294901760
    %v486 = vsub.f32 %v39, %v485
    %487 = vmatpush.msra.mxu0 %v486
    %v488 = vand.u32 %v38, 4294901760
    %v489 = vsub.f32 %v38, %v488
    %490 = vmatpush.msra.mxu0 %v489
    %v491 = vand.u32 %v395, 4294901760
    %v492 = vsub.f32 %v395, %v491
    %493 = vmatmul.f32.gmra.mxu0 %v492
    %v494 = vpop.f32.mrf.mxu0
    %v495 = vadd.f32 %v465, %v494
    %496 = vdwg.mxu0
    %497 = vmatpush.msra.mxu0 0.0
    %498 = vmatpush.msra.mxu0 0.0
    %499 = vmatpush.msra.mxu0 0.0
    %500 = vmatpush.msra.mxu0 0.0
    %501 = vmatpush.msra.mxu0 0.0
    %502 = vmatpush.msra.mxu0 0.0
    %503 = vmatpush.msra.mxu0 0.0
    %504 = vmatpush.msra.mxu0 0.0
    %505 = vmatpush.msra.mxu0 0.0
    %506 = vmatpush.msra.mxu0 0.0
    %507 = vmatpush.msra.mxu0 0.0
    %508 = vmatpush.msra.mxu0 0.0
    %v509 = vand.u32 %v41, 4294901760
    %510 = vmatpush.msra.mxu0 %v509
    %v511 = vand.u32 %v40, 4294901760
    %512 = vmatpush.msra.mxu0 %v511
    %v513 = vand.u32 %v39, 4294901760
    %514 = vmatpush.msra.mxu0 %v513
    %v515 = vand.u32 %v38, 4294901760
    %516 = vmatpush.msra.mxu0 %v515
    %v517 = vand.u32 %v395, 4294901760
    %v518 = vsub.f32 %v395, %v517
    %v519 = vand.u32 %v518, 4294901760
    %520 = vmatmul.f32.gmra.mxu0 %v519
    %v521 = vpop.f32.mrf.mxu0
    %v522 = vadd.f32 %v495, %v521
    %523 = vdwg.mxu0
    %524 = vmatpush.msra.mxu0 0.0
    %525 = vmatpush.msra.mxu0 0.0
    %526 = vmatpush.msra.mxu0 0.0
    %527 = vmatpush.msra.mxu0 0.0
    %528 = vmatpush.msra.mxu0 0.0
    %529 = vmatpush.msra.mxu0 0.0
    %530 = vmatpush.msra.mxu0 0.0
    %531 = vmatpush.msra.mxu0 0.0
    %532 = vmatpush.msra.mxu0 0.0
    %533 = vmatpush.msra.mxu0 0.0
    %534 = vmatpush.msra.mxu0 0.0
    %535 = vmatpush.msra.mxu0 0.0
    %v536 = vand.u32 %v41, 4294901760
    %v537 = vsub.f32 %v41, %v536
    %v538 = vand.u32 %v537, 4294901760
    %539 = vmatpush.msra.mxu0 %v538
    %v540 = vand.u32 %v40, 4294901760
    %v541 = vsub.f32 %v40, %v540
    %v542 = vand.u32 %v541, 4294901760
    %543 = vmatpush.msra.mxu0 %v542
    %v544 = vand.u32 %v39, 4294901760
    %v545 = vsub.f32 %v39, %v544
    %v546 = vand.u32 %v545, 4294901760
    %547 = vmatpush.msra.mxu0 %v546
    %v548 = vand.u32 %v38, 4294901760
    %v549 = vsub.f32 %v38, %v548
    %v550 = vand.u32 %v549, 4294901760
    %551 = vmatpush.msra.mxu0 %v550
    %v552 = vand.u32 %v395, 4294901760
    %553 = vmatmul.f32.gmra.mxu0 %v552
    %v554 = vpop.f32.mrf.mxu0
    %v555 = vadd.f32 %v522, %v554
    %556 = vdwg.mxu0
    %557 = vmatpush.msra.mxu0 0.0
    %558 = vmatpush.msra.mxu0 0.0
    %559 = vmatpush.msra.mxu0 0.0
    %560 = vmatpush.msra.mxu0 0.0
    %561 = vmatpush.msra.mxu0 0.0
    %562 = vmatpush.msra.mxu0 0.0
    %563 = vmatpush.msra.mxu0 0.0
    %564 = vmatpush.msra.mxu0 0.0
    %565 = vmatpush.msra.mxu0 0.0
    %566 = vmatpush.msra.mxu0 0.0
    %567 = vmatpush.msra.mxu0 0.0
    %568 = vmatpush.msra.mxu0 0.0
    %v569 = vand.u32 %v41, 4294901760
    %570 = vmatpush.msra.mxu0 %v569
    %v571 = vand.u32 %v40, 4294901760
    %572 = vmatpush.msra.mxu0 %v571
    %v573 = vand.u32 %v39, 4294901760
    %574 = vmatpush.msra.mxu0 %v573
    %v575 = vand.u32 %v38, 4294901760
    %576 = vmatpush.msra.mxu0 %v575
    %v577 = vand.u32 %v395, 4294901760
    %578 = vmatmul.f32.gmra.mxu0 %v577
    %v579 = vpop.f32.mrf.mxu0
    %v580 = vadd.f32 %v555, %v579
    %581 = vdwg.mxu0
    %v582 = vadd.f32 %v21, %v580
    %v583 = vperm.slane %v48, 0
    %v584 = vadd.f32 %v582, %v583
    %v585 = vperm.slane %v47, 0
    %602 = vrot.lane.b32.xlu0 %v22, 96
    %v603 = vpop.permute.xlu0 %602
    %604 = vrot.lane.b32.xlu0 %v23, 96
    %v605 = vpop.permute.xlu0 %604
    %606 = vrot.lane.b32.xlu0 %v24, 96
    %v607 = vpop.permute.xlu0 %606
    %608 = vrot.lane.b32.xlu0 %v25, 96
    %v609 = vpop.permute.xlu0 %608
    %610 = vrot.lane.b32.xlu0 %v26, 96
    %v611 = vpop.permute.xlu0 %610
    %612 = vrot.lane.b32.xlu0 %v27, 96
    %v613 = vpop.permute.xlu0 %612
    %614 = vrot.lane.b32.xlu0 %v28, 96
    %v615 = vpop.permute.xlu0 %614
    %616 = vrot.lane.b32.xlu0 %v29, 96
    %v617 = vpop.permute.xlu0 %616
    %618 = vrot.lane.b32.xlu0 %v30, 96
    %v619 = vpop.permute.xlu0 %618
    %620 = vrot.lane.b32.xlu0 %v31, 96
    %v621 = vpop.permute.xlu0 %620
    %622 = vrot.lane.b32.xlu0 %v32, 96
    %v623 = vpop.permute.xlu0 %622
    %624 = vrot.lane.b32.xlu0 %v33, 96
    %v625 = vpop.permute.xlu0 %624
    %626 = vrot.lane.b32.xlu0 %v34, 96
    %v627 = vpop.permute.xlu0 %626
    %628 = vrot.lane.b32.xlu0 %v35, 96
    %v629 = vpop.permute.xlu0 %628
    %630 = vrot.lane.b32.xlu0 %v36, 96
    %v631 = vpop.permute.xlu0 %630
    %632 = vrot.lane.b32.xlu0 %v37, 96
    %v633 = vpop.permute.xlu0 %632
    %651 = vrot.lane.b32.xlu0 %v585, 96
    %v652 = vpop.permute.xlu0 %651
    %v654 = vand.u32 %v633, 4294901760
    %655 = vmatpush.msra.mxu0 %v654
    %v656 = vand.u32 %v631, 4294901760
    %657 = vmatpush.msra.mxu0 %v656
    %v658 = vand.u32 %v629, 4294901760
    %659 = vmatpush.msra.mxu0 %v658
    %v660 = vand.u32 %v627, 4294901760
    %661 = vmatpush.msra.mxu0 %v660
    %v662 = vand.u32 %v625, 4294901760
    %663 = vmatpush.msra.mxu0 %v662
    %v664 = vand.u32 %v623, 4294901760
    %665 = vmatpush.msra.mxu0 %v664
    %v666 = vand.u32 %v621, 4294901760
    %667 = vmatpush.msra.mxu0 %v666
    %v668 = vand.u32 %v619, 4294901760
    %669 = vmatpush.msra.mxu0 %v668
    %v670 = vand.u32 %v617, 4294901760
    %671 = vmatpush.msra.mxu0 %v670
    %v672 = vand.u32 %v615, 4294901760
    %673 = vmatpush.msra.mxu0 %v672
    %v674 = vand.u32 %v613, 4294901760
    %675 = vmatpush.msra.mxu0 %v674
    %v676 = vand.u32 %v611, 4294901760
    %677 = vmatpush.msra.mxu0 %v676
    %v678 = vand.u32 %v609, 4294901760
    %679 = vmatpush.msra.mxu0 %v678
    %v680 = vand.u32 %v607, 4294901760
    %681 = vmatpush.msra.mxu0 %v680
    %v682 = vand.u32 %v605, 4294901760
    %683 = vmatpush.msra.mxu0 %v682
    %v684 = vand.u32 %v603, 4294901760
    %685 = vmatpush.msra.mxu0 %v684
    %v686 = vand.u32 %v584, 4294901760
    %v687 = vsub.f32 %v584, %v686
    %v688 = vand.u32 %v687, 4294901760
    %v689 = vsub.f32 %v687, %v688
    %v690 = vand.u32 %v689, 4294901760
    %691 = vmatmul.f32.gmra.mxu0 %v690
    %v692 = vpop.f32.mrf.mxu0
    %v693 = vadd.f32 %v652, %v692
    %694 = vdwg.mxu0
    %v695 = vand.u32 %v633, 4294901760
    %v696 = vsub.f32 %v633, %v695
    %v697 = vand.u32 %v696, 4294901760
    %v698 = vsub.f32 %v696, %v697
    %v699 = vand.u32 %v698, 4294901760
    %700 = vmatpush.msra.mxu0 %v699
    %v701 = vand.u32 %v631, 4294901760
    %v702 = vsub.f32 %v631, %v701
    %v703 = vand.u32 %v702, 4294901760
    %v704 = vsub.f32 %v702, %v703
    %v705 = vand.u32 %v704, 4294901760
    %706 = vmatpush.msra.mxu0 %v705
    %v707 = vand.u32 %v629, 4294901760
    %v708 = vsub.f32 %v629, %v707
    %v709 = vand.u32 %v708, 4294901760
    %v710 = vsub.f32 %v708, %v709
    %v711 = vand.u32 %v710, 4294901760
    %712 = vmatpush.msra.mxu0 %v711
    %v713 = vand.u32 %v627, 4294901760
    %v714 = vsub.f32 %v627, %v713
    %v715 = vand.u32 %v714, 4294901760
    %v716 = vsub.f32 %v714, %v715
    %v717 = vand.u32 %v716, 4294901760
    %718 = vmatpush.msra.mxu0 %v717
    %v719 = vand.u32 %v625, 4294901760
    %v720 = vsub.f32 %v625, %v719
    %v721 = vand.u32 %v720, 4294901760
    %v722 = vsub.f32 %v720, %v721
    %v723 = vand.u32 %v722, 4294901760
    %724 = vmatpush.msra.mxu0 %v723
    %v725 = vand.u32 %v623, 4294901760
    %v726 = vsub.f32 %v623, %v725
    %v727 = vand.u32 %v726, 4294901760
    %v728 = vsub.f32 %v726, %v727
    %v729 = vand.u32 %v728, 4294901760
    %730 = vmatpush.msra.mxu0 %v729
    %v731 = vand.u32 %v621, 4294901760
    %v732 = vsub.f32 %v621, %v731
    %v733 = vand.u32 %v732, 4294901760
    %v734 = vsub.f32 %v732, %v733
    %v735 = vand.u32 %v734, 4294901760
    %736 = vmatpush.msra.mxu0 %v735
    %v737 = vand.u32 %v619, 4294901760
    %v738 = vsub.f32 %v619, %v737
    %v739 = vand.u32 %v738, 4294901760
    %v740 = vsub.f32 %v738, %v739
    %v741 = vand.u32 %v740, 4294901760
    %742 = vmatpush.msra.mxu0 %v741
    %v743 = vand.u32 %v617, 4294901760
    %v744 = vsub.f32 %v617, %v743
    %v745 = vand.u32 %v744, 4294901760
    %v746 = vsub.f32 %v744, %v745
    %v747 = vand.u32 %v746, 4294901760
    %748 = vmatpush.msra.mxu0 %v747
    %v749 = vand.u32 %v615, 4294901760
    %v750 = vsub.f32 %v615, %v749
    %v751 = vand.u32 %v750, 4294901760
    %v752 = vsub.f32 %v750, %v751
    %v753 = vand.u32 %v752, 4294901760
    %754 = vmatpush.msra.mxu0 %v753
    %v755 = vand.u32 %v613, 4294901760
    %v756 = vsub.f32 %v613, %v755
    %v757 = vand.u32 %v756, 4294901760
    %v758 = vsub.f32 %v756, %v757
    %v759 = vand.u32 %v758, 4294901760
    %760 = vmatpush.msra.mxu0 %v759
    %v761 = vand.u32 %v611, 4294901760
    %v762 = vsub.f32 %v611, %v761
    %v763 = vand.u32 %v762, 4294901760
    %v764 = vsub.f32 %v762, %v763
    %v765 = vand.u32 %v764, 4294901760
    %766 = vmatpush.msra.mxu0 %v765
    %v767 = vand.u32 %v609, 4294901760
    %v768 = vsub.f32 %v609, %v767
    %v769 = vand.u32 %v768, 4294901760
    %v770 = vsub.f32 %v768, %v769
    %v771 = vand.u32 %v770, 4294901760
    %772 = vmatpush.msra.mxu0 %v771
    %v773 = vand.u32 %v607, 4294901760
    %v774 = vsub.f32 %v607, %v773
    %v775 = vand.u32 %v774, 4294901760
    %v776 = vsub.f32 %v774, %v775
    %v777 = vand.u32 %v776, 4294901760
    %778 = vmatpush.msra.mxu0 %v777
    %v779 = vand.u32 %v605, 4294901760
    %v780 = vsub.f32 %v605, %v779
    %v781 = vand.u32 %v780, 4294901760
    %v782 = vsub.f32 %v780, %v781
    %v783 = vand.u32 %v782, 4294901760
    %784 = vmatpush.msra.mxu0 %v783
    %v785 = vand.u32 %v603, 4294901760
    %v786 = vsub.f32 %v603, %v785
    %v787 = vand.u32 %v786, 4294901760
    %v788 = vsub.f32 %v786, %v787
    %v789 = vand.u32 %v788, 4294901760
    %790 = vmatpush.msra.mxu0 %v789
    %v791 = vand.u32 %v584, 4294901760
    %792 = vmatmul.f32.gmra.mxu0 %v791
    %v793 = vpop.f32.mrf.mxu0
    %v794 = vadd.f32 %v693, %v793
    %795 = vdwg.mxu0
    %v796 = vand.u32 %v633, 4294901760
    %v797 = vsub.f32 %v633, %v796
    %798 = vmatpush.msra.mxu0 %v797
    %v799 = vand.u32 %v631, 4294901760
    %v800 = vsub.f32 %v631, %v799
    %801 = vmatpush.msra.mxu0 %v800
    %v802 = vand.u32 %v629, 4294901760
    %v803 = vsub.f32 %v629, %v802
    %804 = vmatpush.msra.mxu0 %v803
    %v805 = vand.u32 %v627, 4294901760
    %v806 = vsub.f32 %v627, %v805
    %807 = vmatpush.msra.mxu0 %v806
    %v808 = vand.u32 %v625, 4294901760
    %v809 = vsub.f32 %v625, %v808
    %810 = vmatpush.msra.mxu0 %v809
    %v811 = vand.u32 %v623, 4294901760
    %v812 = vsub.f32 %v623, %v811
    %813 = vmatpush.msra.mxu0 %v812
    %v814 = vand.u32 %v621, 4294901760
    %v815 = vsub.f32 %v621, %v814
    %816 = vmatpush.msra.mxu0 %v815
    %v817 = vand.u32 %v619, 4294901760
    %v818 = vsub.f32 %v619, %v817
    %819 = vmatpush.msra.mxu0 %v818
    %v820 = vand.u32 %v617, 4294901760
    %v821 = vsub.f32 %v617, %v820
    %822 = vmatpush.msra.mxu0 %v821
    %v823 = vand.u32 %v615, 4294901760
    %v824 = vsub.f32 %v615, %v823
    %825 = vmatpush.msra.mxu0 %v824
    %v826 = vand.u32 %v613, 4294901760
    %v827 = vsub.f32 %v613, %v826
    %828 = vmatpush.msra.mxu0 %v827
    %v829 = vand.u32 %v611, 4294901760
    %v830 = vsub.f32 %v611, %v829
    %831 = vmatpush.msra.mxu0 %v830
    %v832 = vand.u32 %v609, 4294901760
    %v833 = vsub.f32 %v609, %v832
    %834 = vmatpush.msra.mxu0 %v833
    %v835 = vand.u32 %v607, 4294901760
    %v836 = vsub.f32 %v607, %v835
    %837 = vmatpush.msra.mxu0 %v836
    %v838 = vand.u32 %v605, 4294901760
    %v839 = vsub.f32 %v605, %v838
    %840 = vmatpush.msra.mxu0 %v839
    %v841 = vand.u32 %v603, 4294901760
    %v842 = vsub.f32 %v603, %v841
    %843 = vmatpush.msra.mxu0 %v842
    %v844 = vand.u32 %v584, 4294901760
    %v845 = vsub.f32 %v584, %v844
    %846 = vmatmul.f32.gmra.mxu0 %v845
    %v847 = vpop.f32.mrf.mxu0
    %v848 = vadd.f32 %v794, %v847
    %849 = vdwg.mxu0
    %v850 = vand.u32 %v633, 4294901760
    %851 = vmatpush.msra.mxu0 %v850
    %v852 = vand.u32 %v631, 4294901760
    %853 = vmatpush.msra.mxu0 %v852
    %v854 = vand.u32 %v629, 4294901760
    %855 = vmatpush.msra.mxu0 %v854
    %v856 = vand.u32 %v627, 4294901760
    %857 = vmatpush.msra.mxu0 %v856
    %v858 = vand.u32 %v625, 4294901760
    %859 = vmatpush.msra.mxu0 %v858
    %v860 = vand.u32 %v623, 4294901760
    %861 = vmatpush.msra.mxu0 %v860
    %v862 = vand.u32 %v621, 4294901760
    %863 = vmatpush.msra.mxu0 %v862
    %v864 = vand.u32 %v619, 4294901760
    %865 = vmatpush.msra.mxu0 %v864
    %v866 = vand.u32 %v617, 4294901760
    %867 = vmatpush.msra.mxu0 %v866
    %v868 = vand.u32 %v615, 4294901760
    %869 = vmatpush.msra.mxu0 %v868
    %v870 = vand.u32 %v613, 4294901760
    %871 = vmatpush.msra.mxu0 %v870
    %v872 = vand.u32 %v611, 4294901760
    %873 = vmatpush.msra.mxu0 %v872
    %v874 = vand.u32 %v609, 4294901760
    %875 = vmatpush.msra.mxu0 %v874
    %v876 = vand.u32 %v607, 4294901760
    %877 = vmatpush.msra.mxu0 %v876
    %v878 = vand.u32 %v605, 4294901760
    %879 = vmatpush.msra.mxu0 %v878
    %v880 = vand.u32 %v603, 4294901760
    %881 = vmatpush.msra.mxu0 %v880
    %v882 = vand.u32 %v584, 4294901760
    %v883 = vsub.f32 %v584, %v882
    %v884 = vand.u32 %v883, 4294901760
    %885 = vmatmul.f32.gmra.mxu0 %v884
    %v886 = vpop.f32.mrf.mxu0
    %v887 = vadd.f32 %v848, %v886
    %888 = vdwg.mxu0
    %v889 = vand.u32 %v633, 4294901760
    %v890 = vsub.f32 %v633, %v889
    %v891 = vand.u32 %v890, 4294901760
    %892 = vmatpush.msra.mxu0 %v891
    %v893 = vand.u32 %v631, 4294901760
    %v894 = vsub.f32 %v631, %v893
    %v895 = vand.u32 %v894, 4294901760
    %896 = vmatpush.msra.mxu0 %v895
    %v897 = vand.u32 %v629, 4294901760
    %v898 = vsub.f32 %v629, %v897
    %v899 = vand.u32 %v898, 4294901760
    %900 = vmatpush.msra.mxu0 %v899
    %v901 = vand.u32 %v627, 4294901760
    %v902 = vsub.f32 %v627, %v901
    %v903 = vand.u32 %v902, 4294901760
    %904 = vmatpush.msra.mxu0 %v903
    %v905 = vand.u32 %v625, 4294901760
    %v906 = vsub.f32 %v625, %v905
    %v907 = vand.u32 %v906, 4294901760
    %908 = vmatpush.msra.mxu0 %v907
    %v909 = vand.u32 %v623, 4294901760
    %v910 = vsub.f32 %v623, %v909
    %v911 = vand.u32 %v910, 4294901760
    %912 = vmatpush.msra.mxu0 %v911
    %v913 = vand.u32 %v621, 4294901760
    %v914 = vsub.f32 %v621, %v913
    %v915 = vand.u32 %v914, 4294901760
    %916 = vmatpush.msra.mxu0 %v915
    %v917 = vand.u32 %v619, 4294901760
    %v918 = vsub.f32 %v619, %v917
    %v919 = vand.u32 %v918, 4294901760
    %920 = vmatpush.msra.mxu0 %v919
    %v921 = vand.u32 %v617, 4294901760
    %v922 = vsub.f32 %v617, %v921
    %v923 = vand.u32 %v922, 4294901760
    %924 = vmatpush.msra.mxu0 %v923
    %v925 = vand.u32 %v615, 4294901760
    %v926 = vsub.f32 %v615, %v925
    %v927 = vand.u32 %v926, 4294901760
    %928 = vmatpush.msra.mxu0 %v927
    %v929 = vand.u32 %v613, 4294901760
    %v930 = vsub.f32 %v613, %v929
    %v931 = vand.u32 %v930, 4294901760
    %932 = vmatpush.msra.mxu0 %v931
    %v933 = vand.u32 %v611, 4294901760
    %v934 = vsub.f32 %v611, %v933
    %v935 = vand.u32 %v934, 4294901760
    %936 = vmatpush.msra.mxu0 %v935
    %v937 = vand.u32 %v609, 4294901760
    %v938 = vsub.f32 %v609, %v937
    %v939 = vand.u32 %v938, 4294901760
    %940 = vmatpush.msra.mxu0 %v939
    %v941 = vand.u32 %v607, 4294901760
    %v942 = vsub.f32 %v607, %v941
    %v943 = vand.u32 %v942, 4294901760
    %944 = vmatpush.msra.mxu0 %v943
    %v945 = vand.u32 %v605, 4294901760
    %v946 = vsub.f32 %v605, %v945
    %v947 = vand.u32 %v946, 4294901760
    %948 = vmatpush.msra.mxu0 %v947
    %v949 = vand.u32 %v603, 4294901760
    %v950 = vsub.f32 %v603, %v949
    %v951 = vand.u32 %v950, 4294901760
    %952 = vmatpush.msra.mxu0 %v951
    %v953 = vand.u32 %v584, 4294901760
    %954 = vmatmul.f32.gmra.mxu0 %v953
    %v955 = vpop.f32.mrf.mxu0
    %v956 = vadd.f32 %v887, %v955
    %957 = vdwg.mxu0
    %v958 = vand.u32 %v633, 4294901760
    %959 = vmatpush.msra.mxu0 %v958
    %v960 = vand.u32 %v631, 4294901760
    %961 = vmatpush.msra.mxu0 %v960
    %v962 = vand.u32 %v629, 4294901760
    %963 = vmatpush.msra.mxu0 %v962
    %v964 = vand.u32 %v627, 4294901760
    %965 = vmatpush.msra.mxu0 %v964
    %v966 = vand.u32 %v625, 4294901760
    %967 = vmatpush.msra.mxu0 %v966
    %v968 = vand.u32 %v623, 4294901760
    %969 = vmatpush.msra.mxu0 %v968
    %v970 = vand.u32 %v621, 4294901760
    %971 = vmatpush.msra.mxu0 %v970
    %v972 = vand.u32 %v619, 4294901760
    %973 = vmatpush.msra.mxu0 %v972
    %v974 = vand.u32 %v617, 4294901760
    %975 = vmatpush.msra.mxu0 %v974
    %v976 = vand.u32 %v615, 4294901760
    %977 = vmatpush.msra.mxu0 %v976
    %v978 = vand.u32 %v613, 4294901760
    %979 = vmatpush.msra.mxu0 %v978
    %v980 = vand.u32 %v611, 4294901760
    %981 = vmatpush.msra.mxu0 %v980
    %v982 = vand.u32 %v609, 4294901760
    %983 = vmatpush.msra.mxu0 %v982
    %v984 = vand.u32 %v607, 4294901760
    %985 = vmatpush.msra.mxu0 %v984
    %v986 = vand.u32 %v605, 4294901760
    %987 = vmatpush.msra.mxu0 %v986
    %v988 = vand.u32 %v603, 4294901760
    %989 = vmatpush.msra.mxu0 %v988
    %v990 = vand.u32 %v584, 4294901760
    %991 = vmatmul.f32.gmra.mxu0 %v990
    %v992 = vpop.f32.mrf.mxu0
    %v993 = vadd.f32 %v956, %v992
    %994 = vdwg.mxu0
    %v995 = vmax.f32 %v993, 0.0
    %v997 = vsel %vm393, %v995, 0
    %999 = vmatpush.msra.mxu0 0.0
    %1000 = vmatpush.msra.mxu0 0.0
    %1001 = vmatpush.msra.mxu0 0.0
    %1002 = vmatpush.msra.mxu0 0.0
    %1003 = vmatpush.msra.mxu0 0.0
    %1004 = vmatpush.msra.mxu0 0.0
    %1005 = vmatpush.msra.mxu0 0.0
    %1006 = vmatpush.msra.mxu0 0.0
    %1007 = vmatpush.msra.mxu0 0.0
    %1008 = vmatpush.msra.mxu0 0.0
    %1009 = vmatpush.msra.mxu0 0.0
    %1010 = vmatpush.msra.mxu0 0.0
    %v1011 = vand.u32 %v45, 4294901760
    %1012 = vmatpush.msra.mxu0 %v1011
    %v1013 = vand.u32 %v44, 4294901760
    %1014 = vmatpush.msra.mxu0 %v1013
    %v1015 = vand.u32 %v43, 4294901760
    %1016 = vmatpush.msra.mxu0 %v1015
    %v1017 = vand.u32 %v42, 4294901760
    %1018 = vmatpush.msra.mxu0 %v1017
    %v1019 = vand.u32 %v997, 4294901760
    %v1020 = vsub.f32 %v997, %v1019
    %v1021 = vand.u32 %v1020, 4294901760
    %v1022 = vsub.f32 %v1020, %v1021
    %v1023 = vand.u32 %v1022, 4294901760
    %1024 = vmatmul.f32.gmra.mxu0 %v1023
    %v1025 = vpop.f32.mrf.mxu0
    %v1026 = vadd.f32 0.0, %v1025
    %1027 = vdwg.mxu0
    %1028 = vmatpush.msra.mxu0 0.0
    %1029 = vmatpush.msra.mxu0 0.0
    %1030 = vmatpush.msra.mxu0 0.0
    %1031 = vmatpush.msra.mxu0 0.0
    %1032 = vmatpush.msra.mxu0 0.0
    %1033 = vmatpush.msra.mxu0 0.0
    %1034 = vmatpush.msra.mxu0 0.0
    %1035 = vmatpush.msra.mxu0 0.0
    %1036 = vmatpush.msra.mxu0 0.0
    %1037 = vmatpush.msra.mxu0 0.0
    %1038 = vmatpush.msra.mxu0 0.0
    %1039 = vmatpush.msra.mxu0 0.0
    %v1040 = vand.u32 %v45, 4294901760
    %v1041 = vsub.f32 %v45, %v1040
    %v1042 = vand.u32 %v1041, 4294901760
    %v1043 = vsub.f32 %v1041, %v1042
    %v1044 = vand.u32 %v1043, 4294901760
    %1045 = vmatpush.msra.mxu0 %v1044
    %v1046 = vand.u32 %v44, 4294901760
    %v1047 = vsub.f32 %v44, %v1046
    %v1048 = vand.u32 %v1047, 4294901760
    %v1049 = vsub.f32 %v1047, %v1048
    %v1050 = vand.u32 %v1049, 4294901760
    %1051 = vmatpush.msra.mxu0 %v1050
    %v1052 = vand.u32 %v43, 4294901760
    %v1053 = vsub.f32 %v43, %v1052
    %v1054 = vand.u32 %v1053, 4294901760
    %v1055 = vsub.f32 %v1053, %v1054
    %v1056 = vand.u32 %v1055, 4294901760
    %1057 = vmatpush.msra.mxu0 %v1056
    %v1058 = vand.u32 %v42, 4294901760
    %v1059 = vsub.f32 %v42, %v1058
    %v1060 = vand.u32 %v1059, 4294901760
    %v1061 = vsub.f32 %v1059, %v1060
    %v1062 = vand.u32 %v1061, 4294901760
    %1063 = vmatpush.msra.mxu0 %v1062
    %v1064 = vand.u32 %v997, 4294901760
    %1065 = vmatmul.f32.gmra.mxu0 %v1064
    %v1066 = vpop.f32.mrf.mxu0
    %v1067 = vadd.f32 %v1026, %v1066
    %1068 = vdwg.mxu0
    %1069 = vmatpush.msra.mxu0 0.0
    %1070 = vmatpush.msra.mxu0 0.0
    %1071 = vmatpush.msra.mxu0 0.0
    %1072 = vmatpush.msra.mxu0 0.0
    %1073 = vmatpush.msra.mxu0 0.0
    %1074 = vmatpush.msra.mxu0 0.0
    %1075 = vmatpush.msra.mxu0 0.0
    %1076 = vmatpush.msra.mxu0 0.0
    %1077 = vmatpush.msra.mxu0 0.0
    %1078 = vmatpush.msra.mxu0 0.0
    %1079 = vmatpush.msra.mxu0 0.0
    %1080 = vmatpush.msra.mxu0 0.0
    %v1081 = vand.u32 %v45, 4294901760
    %v1082 = vsub.f32 %v45, %v1081
    %1083 = vmatpush.msra.mxu0 %v1082
    %v1084 = vand.u32 %v44, 4294901760
    %v1085 = vsub.f32 %v44, %v1084
    %1086 = vmatpush.msra.mxu0 %v1085
    %v1087 = vand.u32 %v43, 4294901760
    %v1088 = vsub.f32 %v43, %v1087
    %1089 = vmatpush.msra.mxu0 %v1088
    %v1090 = vand.u32 %v42, 4294901760
    %v1091 = vsub.f32 %v42, %v1090
    %1092 = vmatpush.msra.mxu0 %v1091
    %v1093 = vand.u32 %v997, 4294901760
    %v1094 = vsub.f32 %v997, %v1093
    %1095 = vmatmul.f32.gmra.mxu0 %v1094
    %v1096 = vpop.f32.mrf.mxu0
    %v1097 = vadd.f32 %v1067, %v1096
    %1098 = vdwg.mxu0
    %1099 = vmatpush.msra.mxu0 0.0
    %1100 = vmatpush.msra.mxu0 0.0
    %1101 = vmatpush.msra.mxu0 0.0
    %1102 = vmatpush.msra.mxu0 0.0
    %1103 = vmatpush.msra.mxu0 0.0
    %1104 = vmatpush.msra.mxu0 0.0
    %1105 = vmatpush.msra.mxu0 0.0
    %1106 = vmatpush.msra.mxu0 0.0
    %1107 = vmatpush.msra.mxu0 0.0
    %1108 = vmatpush.msra.mxu0 0.0
    %1109 = vmatpush.msra.mxu0 0.0
    %1110 = vmatpush.msra.mxu0 0.0
    %v1111 = vand.u32 %v45, 4294901760
    %1112 = vmatpush.msra.mxu0 %v1111
    %v1113 = vand.u32 %v44, 4294901760
    %1114 = vmatpush.msra.mxu0 %v1113
    %v1115 = vand.u32 %v43, 4294901760
    %1116 = vmatpush.msra.mxu0 %v1115
    %v1117 = vand.u32 %v42, 4294901760
    %1118 = vmatpush.msra.mxu0 %v1117
    %v1119 = vand.u32 %v997, 4294901760
    %v1120 = vsub.f32 %v997, %v1119
    %v1121 = vand.u32 %v1120, 4294901760
    %1122 = vmatmul.f32.gmra.mxu0 %v1121
    %v1123 = vpop.f32.mrf.mxu0
    %v1124 = vadd.f32 %v1097, %v1123
    %1125 = vdwg.mxu0
    %1126 = vmatpush.msra.mxu0 0.0
    %1127 = vmatpush.msra.mxu0 0.0
    %1128 = vmatpush.msra.mxu0 0.0
    %1129 = vmatpush.msra.mxu0 0.0
    %1130 = vmatpush.msra.mxu0 0.0
    %1131 = vmatpush.msra.mxu0 0.0
    %1132 = vmatpush.msra.mxu0 0.0
    %1133 = vmatpush.msra.mxu0 0.0
    %1134 = vmatpush.msra.mxu0 0.0
    %1135 = vmatpush.msra.mxu0 0.0
    %1136 = vmatpush.msra.mxu0 0.0
    %1137 = vmatpush.msra.mxu0 0.0
    %v1138 = vand.u32 %v45, 4294901760
    %v1139 = vsub.f32 %v45, %v1138
    %v1140 = vand.u32 %v1139, 4294901760
    %1141 = vmatpush.msra.mxu0 %v1140
    %v1142 = vand.u32 %v44, 4294901760
    %v1143 = vsub.f32 %v44, %v1142
    %v1144 = vand.u32 %v1143, 4294901760
    %1145 = vmatpush.msra.mxu0 %v1144
    %v1146 = vand.u32 %v43, 4294901760
    %v1147 = vsub.f32 %v43, %v1146
    %v1148 = vand.u32 %v1147, 4294901760
    %1149 = vmatpush.msra.mxu0 %v1148
    %v1150 = vand.u32 %v42, 4294901760
    %v1151 = vsub.f32 %v42, %v1150
    %v1152 = vand.u32 %v1151, 4294901760
    %1153 = vmatpush.msra.mxu0 %v1152
    %v1154 = vand.u32 %v997, 4294901760
    %1155 = vmatmul.f32.gmra.mxu0 %v1154
    %v1156 = vpop.f32.mrf.mxu0
    %v1157 = vadd.f32 %v1124, %v1156
    %1158 = vdwg.mxu0
    %1159 = vmatpush.msra.mxu0 0.0
    %1160 = vmatpush.msra.mxu0 0.0
    %1161 = vmatpush.msra.mxu0 0.0
    %1162 = vmatpush.msra.mxu0 0.0
    %1163 = vmatpush.msra.mxu0 0.0
    %1164 = vmatpush.msra.mxu0 0.0
    %1165 = vmatpush.msra.mxu0 0.0
    %1166 = vmatpush.msra.mxu0 0.0
    %1167 = vmatpush.msra.mxu0 0.0
    %1168 = vmatpush.msra.mxu0 0.0
    %1169 = vmatpush.msra.mxu0 0.0
    %1170 = vmatpush.msra.mxu0 0.0
    %v1171 = vand.u32 %v45, 4294901760
    %1172 = vmatpush.msra.mxu0 %v1171
    %v1173 = vand.u32 %v44, 4294901760
    %1174 = vmatpush.msra.mxu0 %v1173
    %v1175 = vand.u32 %v43, 4294901760
    %1176 = vmatpush.msra.mxu0 %v1175
    %v1177 = vand.u32 %v42, 4294901760
    %1178 = vmatpush.msra.mxu0 %v1177
    %v1179 = vand.u32 %v997, 4294901760
    %1180 = vmatmul.f32.gmra.mxu0 %v1179
    %v1181 = vpop.f32.mrf.mxu0
    %v1182 = vadd.f32 %v1157, %v1181
    %1183 = vdwg.mxu0
    %v1184 = vadd.f32 %v584, %v1182
    %v1185 = vperm.slane %v49, 0
    %v1186 = vadd.f32 %v1184, %v1185
    %1187 = vst [vmem:[#allocation2] sm:$0xff] %v1186
    // Predicated region
    $region22: #{tpu_custom_call.1} parent=1 // pred_check
      _
    $region23: #{tpu_custom_call.1} parent=1 // pred_check_branch
      %1189 = sbr.rel (0) target = $region25
    $region24: #{tpu_custom_call.1} parent=1 // pred_region
      %1191 = vsyncadd [#allocation3], 64
      %s1192 = sshll.u32 [#allocation2], 4
      %s1193 = int_to_ptr.vmem [resolvable:$true] %s1192
      %s1194 = sshll.u32 %s5, 4
      %s1195 = int_to_ptr.hbm [resolvable:$true] %s1194
      %1200 = dma.vmem_to_hbm [thread:$0]  %s1193, 64, %s1195, [#allocation3], 64, 64, 4
    $region25: #{tpu_custom_call.1} parent=1 // pred_fallthru
      _
    // Predicated region
    $region26: #{tpu_custom_call.1} parent=1 // pred_check
      _
    $region27: #{tpu_custom_call.1} parent=1 // pred_check_branch
      %1202 = sbr.rel (0) target = $region29
    $region28: #{tpu_custom_call.1} parent=1 // pred_region
      %1204 = dma.done [#allocation3], 128
    $region29: #{tpu_custom_call.1} parent=1 // pred_fallthru
      _
    %1205 = vsyncpa [#allocation3], 1

</llo_original>
